<compile_context>
chip_gen: v5e
topology: v5e:2x2
jax: 0.10.0
libtpu: 0.0.40
codegen_flags: <defaults>
</compile_context>

<pallas_src>
import numpy as np
import jax
import jax.numpy as jnp
from jax.experimental import pallas as pl
from jax.experimental.pallas import tpu as pltpu

# ---- module configuration (consistent with the PyTorch __init__) ----
HIDDEN = 32
HEAD_SIZE = 8
NUM_HEADS = 4
OUT_SIZE = HEAD_SIZE * NUM_HEADS  # 32
BATCH = 2
LENGTH = 8
DROPOUT_RATE = 0.1     # TODO(synk): nn.Dropout treated as identity (eval / inference semantics).
NEG_FILL = -1e30       # finite mask fill (avoids -inf - (-inf) = NaN)
LN_EPS = 1e-12         # NaN guard only; negligible vs torch's (x - mean) / std


def mha_kernel(x_ref, keymask_ref, qmask_ref, wqkv_ref, bqkv_ref,
               wo_ref, bo_ref, gamma_ref, beta_ref, o_ref):
    BL = BATCH * LENGTH
    D3 = 3 * HEAD_SIZE

    xf = x_ref[...]                                 # (BL, H) f32, kept for the residual
    x_bf = xf.astype(jnp.bfloat16)                  # bf16 feed for the MXU

    # ---- fused QKV projection: ONE 2-D matmul (single MXU push) ----
    # wqkv columns are packed per head as [q(8) | k(8) | v(8)] (head-major).
    qkv = jnp.dot(x_bf, wqkv_ref[...],
                  preferred_element_type=jnp.float32) + bqkv_ref[...]   # (BL, NH*3D)

    # Head-leading q/k/v without rank-3 transposes: static lane slices + stack on a
    # new leading axis, then minor-dim slices.
    qkv_h = jnp.stack(
        [qkv[:, h * D3:(h + 1) * D3] for h in range(NUM_HEADS)], axis=0)  # (NH, BL, 3D)
    q = qkv_h[..., :HEAD_SIZE].astype(jnp.bfloat16)                       # (NH, BL, D)
    k = qkv_h[..., HEAD_SIZE:2 * HEAD_SIZE].astype(jnp.bfloat16)          # (NH, BL, D)
    v = qkv_h[..., 2 * HEAD_SIZE:].astype(jnp.bfloat16)                   # (NH, BL, D)

    # ---- attention scores, all heads & batches at once (leading-batch einsum) ----
    scale = 1.0 / (HEAD_SIZE ** 0.5)
    scores = jnp.einsum('hqd,hkd->hqk', q, k,
                        preferred_element_type=jnp.float32) * scale       # (NH, BL, BL)

    # Combined key mask (block-diagonal same-batch AND key-valid), precomputed in the
    # wrapper -> single where with a finite fill.
    scores = jnp.where(keymask_ref[...] == 0.0, NEG_FILL, scores)

    # Softmax over keys (f32); the divide goes to the EUP via approximate reciprocal.
    m = jnp.max(scores, axis=-1, keepdims=True)
    e = jnp.exp(scores - m)
    denom = jnp.sum(e, axis=-1, keepdims=True)
    weights = e * pl.reciprocal(denom, approx=True)
    weights = weights * qmask_ref[...]                                    # zero masked queries

    # ---- head merge folded into the output projection (associativity) ----
    #   out = sum_h weights_h @ (v_h @ Wo_h)
    vo = jnp.einsum('hkd,hdo->hko', v, wo_ref[...],
                    preferred_element_type=jnp.float32)                   # (NH, BL, H)
    out_h = jnp.einsum('hqk,hko->hqo',
                       weights.astype(jnp.bfloat16), vo.astype(jnp.bfloat16),
                       preferred_element_type=jnp.float32)                # (NH, BL, H)
    attn_out = jnp.sum(out_h, axis=0) + bo_ref[...]                       # (BL, H)

    # ---- residual + normalization over the SEQUENCE dim per batch (torch ddof=1) ----
    xres = xf + attn_out                                                  # (BL, H)
    xr = xres.reshape(BATCH, LENGTH, HIDDEN)
    mean = jnp.mean(xr, axis=1, keepdims=True)
    var = jnp.sum((xr - mean) ** 2, axis=1, keepdims=True) / (LENGTH - 1)
    normalized = (xr - mean) * jax.lax.rsqrt(var + LN_EPS)
    normalized = normalized * gamma_ref[...] + beta_ref[...]              # (B, L, H)

    # Direct (B, L, H) store — no 128-lane pad, no wrapper slice-copy.
    o_ref[...] = normalized.astype(o_ref.dtype)


@jax.jit
def mha_pallas(x, attention_mask, params):
    """x: (B, L, H) float32, attention_mask: (B, L) float32 (1 = keep, 0 = mask)."""
    B, L, H = x.shape
    wq, bq, wk, bk, wv, bv, wo, bo, gamma, beta = params
    BL = B * L

    # ---- one-time wrapper-side packing ----
    # Fused QKV weight (H, NH*3D), columns packed per head as [q | k | v]; bf16 for MXU.
    w_blocks, b_blocks = [], []
    for h in range(NUM_HEADS):
        sl = slice(h * HEAD_SIZE, (h + 1) * HEAD_SIZE)
        w_blocks += [wq[:, sl], wk[:, sl], wv[:, sl]]
        b_blocks += [bq[sl], bk[sl], bv[sl]]
    wqkv2d = jnp.concatenate(w_blocks, axis=1).astype(jnp.bfloat16)       # (H, NH*3D)
    bqkv2d = jnp.concatenate(b_blocks).reshape(1, -1)                     # (1, NH*3D) f32

    # Output projection per head: (NH, D, H), bf16 MXU operand.
    wo_heads = wo.reshape(NUM_HEADS, HEAD_SIZE, H).astype(jnp.bfloat16)

    xf = x.reshape(BL, H)
    maskf = attention_mask.astype(jnp.float32).reshape(BL)
    # Static block-diagonal structure baked at trace time (numpy constant) and fused
    # with key validity into one (BL, BL) mask -> single jnp.where in the kernel.
    block_diag = np.kron(np.eye(B, dtype=np.float32), np.ones((L, L), np.float32))
    key_mask = jnp.asarray(block_diag) * maskf[None, :]                   # (BL, BL)
    q_mask = maskf.reshape(BL, 1)                                         # (BL, 1)

    bo2 = bo.reshape(1, H)
    g2 = gamma.reshape(1, H)
    be2 = beta.reshape(1, H)

    cost = pl.CostEstimate(flops=213_000, transcendentals=1_200, bytes_accessed=15_000)
    vmem_specs = [pl.BlockSpec(memory_space=pltpu.MemorySpace.VMEM) for _ in range(9)]

    # Single invocation (no grid): the whole problem fits trivially in VMEM and one
    # call avoids per-step grid overhead.  (Add a parallel query-tile grid only when
    # B*L grows large enough to matter / to use v7x's second TensorCore.)
    return pl.pallas_call(
        mha_kernel,
        out_shape=jax.ShapeDtypeStruct((B, L, H), x.dtype),
        in_specs=vmem_specs,
        out_specs=pl.BlockSpec(memory_space=pltpu.MemorySpace.VMEM),
        cost_estimate=cost,
    )(xf, key_mask, q_mask, wqkv2d, bqkv2d, wo_heads, bo2, g2, be2)


def mha_reference(x, attention_mask, params):
    """Pure-JAX f32 reference mirroring the PyTorch forward + __call__ (dropout=identity)."""
    wq, bq, wk, bk, wv, bv, wo, bo, gamma, beta = params
    B, L, H = x.shape

    def proj(w, b):
        return (x @ w + b).reshape(B, L, NUM_HEADS, HEAD_SIZE).transpose(0, 2, 1, 3)

    q, k, v = proj(wq, bq), proj(wk, bk), proj(wv, bv)
    scores = jnp.einsum('bhqd,bhkd->bhqk', q, k) / (HEAD_SIZE ** 0.5)
    key_mask = attention_mask[:, None, None, :]
    scores = jnp.where(key_mask == 0, -jnp.inf, scores)
    weights = jax.nn.softmax(scores, axis=-1)
    weights = weights * attention_mask[:, None, :, None]
    ctx = jnp.einsum('bhqk,bhkd->bhqd', weights, v)
    combined = ctx.transpose(0, 2, 1, 3).reshape(B, L, OUT_SIZE)
    out = combined @ wo + bo
    xres = x + out
    mean = jnp.mean(xres, axis=1, keepdims=True)
    std = jnp.std(xres, axis=1, keepdims=True, ddof=1)
    return (xres - mean) / std * gamma + beta


def init_params(key):
    ks = jax.random.split(key, 8)

    def lin(kw, kb, fan_in, fan_out):
        bound = 1.0 / (fan_in ** 0.5)
        w = jax.random.uniform(kw, (fan_in, fan_out), jnp.float32, -bound, bound)
        b = jax.random.uniform(kb, (fan_out,), jnp.float32, -bound, bound)
        return w, b

    wq, bq = lin(ks[0], ks[1], HIDDEN, OUT_SIZE)
    wk, bk = lin(ks[2], ks[3], HIDDEN, OUT_SIZE)
    wv, bv = lin(ks[4], ks[5], HIDDEN, OUT_SIZE)
    wo, bo = lin(ks[6], ks[7], OUT_SIZE, HIDDEN)
    gamma = jnp.ones((HIDDEN,), jnp.float32)
    beta = jnp.zeros((HIDDEN,), jnp.float32)
    return (wq, bq, wk, bk, wv, bv, wo, bo, gamma, beta)


if __name__ == "__main__":
    key = jax.random.PRNGKey(0)
    kx, kp = jax.random.split(key)
    x = jax.random.normal(kx, (BATCH, LENGTH, HIDDEN), jnp.float32)
    # deterministic mask: batch 0 fully valid, batch 1 has its last 3 positions masked
    attention_mask = jnp.array(
        [[1.0] * LENGTH,
         [1.0] * (LENGTH - 3) + [0.0] * 3], dtype=jnp.float32)
    params = init_params(kp)

    out = jax.block_until_ready(mha_pallas(x, attention_mask, params))
    ref = mha_reference(x, attention_mask, params)
    err = float(jnp.max(jnp.abs(out - ref)))
    # Tolerance accounts for bf16 MXU operands (per the perf review) and the EUP
    # approximate reciprocal in the softmax; accumulations remain f32.
    assert jnp.allclose(out, ref, atol=3e-2, rtol=3e-2), f"max abs err {err}"
    print("KERNEL_OK")
</pallas_src>

<mosaic_0001>
module attributes {stable_mosaic.version = 11 : i64} {
  func.func @mha_kernel(%arg0: memref<16x32xf32, #tpu.memory_space<vmem>>, %arg1: memref<16x16xf32, #tpu.memory_space<vmem>>, %arg2: memref<16x1xf32, #tpu.memory_space<vmem>>, %arg3: memref<32x96xbf16, #tpu.memory_space<vmem>>, %arg4: memref<1x96xf32, #tpu.memory_space<vmem>>, %arg5: memref<4x8x32xbf16, #tpu.memory_space<vmem>>, %arg6: memref<1x32xf32, #tpu.memory_space<vmem>>, %arg7: memref<1x32xf32, #tpu.memory_space<vmem>>, %arg8: memref<1x32xf32, #tpu.memory_space<vmem>>, %arg9: memref<2x8x32xf32, #tpu.memory_space<vmem>>) attributes {dimension_semantics = [], scalar_prefetch = 0 : i64, scratch_operands = 0 : i64, tpu.core_type = #tpu.core_type<tc>} {
    %c0 = arith.constant 0 : index
    %c0_0 = arith.constant 0 : index
    %0 = vector.load %arg0[%c0, %c0_0] : memref<16x32xf32, #tpu.memory_space<vmem>>, vector<16x32xf32>
    %1 = arith.truncf %0 : vector<16x32xf32> to vector<16x32xbf16>
    %c0_1 = arith.constant 0 : index
    %c0_2 = arith.constant 0 : index
    %2 = vector.load %arg3[%c0_1, %c0_2] : memref<32x96xbf16, #tpu.memory_space<vmem>>, vector<32x96xbf16>
    %cst = arith.constant dense<0.000000e+00> : vector<16x96xf32>
    %3 = tpu.matmul %1, %2, %cst {dimension_numbers = #tpu.dot_dimension_numbers<[1], [0], [0], [1], [0, 0, 1, 1], [], []>} : vector<16x32xbf16>, vector<32x96xbf16>, vector<16x96xf32> -> vector<16x96xf32>
    %c0_3 = arith.constant 0 : index
    %c0_4 = arith.constant 0 : index
    %4 = vector.load %arg4[%c0_3, %c0_4] : memref<1x96xf32, #tpu.memory_space<vmem>>, vector<1x96xf32>
    %5 = vector.broadcast %4 : vector<1x96xf32> to vector<16x96xf32>
    %6 = arith.addf %3, %5 : vector<16x96xf32>
    %7 = vector.extract_strided_slice %6 {offsets = [0, 0], sizes = [16, 24], strides = [1, 1]} : vector<16x96xf32> to vector<16x24xf32>
    %8 = vector.extract_strided_slice %6 {offsets = [0, 24], sizes = [16, 24], strides = [1, 1]} : vector<16x96xf32> to vector<16x24xf32>
    %9 = vector.extract_strided_slice %6 {offsets = [0, 48], sizes = [16, 24], strides = [1, 1]} : vector<16x96xf32> to vector<16x24xf32>
    %10 = vector.extract_strided_slice %6 {offsets = [0, 72], sizes = [16, 24], strides = [1, 1]} : vector<16x96xf32> to vector<16x24xf32>
    %11 = vector.shape_cast %7 : vector<16x24xf32> to vector<1x16x24xf32>
    %12 = vector.shape_cast %8 : vector<16x24xf32> to vector<1x16x24xf32>
    %13 = vector.shape_cast %9 : vector<16x24xf32> to vector<1x16x24xf32>
    %14 = vector.shape_cast %10 : vector<16x24xf32> to vector<1x16x24xf32>
    %15 = tpu.concatenate %11, %12, %13, %14 in 0 : vector<1x16x24xf32>, vector<1x16x24xf32>, vector<1x16x24xf32>, vector<1x16x24xf32> -> vector<4x16x24xf32>
    %16 = vector.extract_strided_slice %15 {offsets = [0, 0, 0], sizes = [4, 16, 8], strides = [1, 1, 1]} : vector<4x16x24xf32> to vector<4x16x8xf32>
    %17 = arith.truncf %16 : vector<4x16x8xf32> to vector<4x16x8xbf16>
    %18 = vector.extract_strided_slice %15 {offsets = [0, 0, 8], sizes = [4, 16, 8], strides = [1, 1, 1]} : vector<4x16x24xf32> to vector<4x16x8xf32>
    %19 = arith.truncf %18 : vector<4x16x8xf32> to vector<4x16x8xbf16>
    %20 = vector.extract_strided_slice %15 {offsets = [0, 0, 16], sizes = [4, 16, 8], strides = [1, 1, 1]} : vector<4x16x24xf32> to vector<4x16x8xf32>
    %21 = arith.truncf %20 : vector<4x16x8xf32> to vector<4x16x8xbf16>
    "tpu.trace_start"() <{level = 10 : i32, message = "hqd,hkd->hqk"}> : () -> ()
    %cst_5 = arith.constant dense<0.000000e+00> : vector<4x16x16xf32>
    %22 = tpu.matmul %17, %19, %cst_5 {dimension_numbers = #tpu.dot_dimension_numbers<[2], [2], [1], [1], [0, 0, 0, 1, 1, 1], [0], [0]>} : vector<4x16x8xbf16>, vector<4x16x8xbf16>, vector<4x16x16xf32> -> vector<4x16x16xf32>
    "tpu.trace_stop"() : () -> ()
    %cst_6 = arith.constant 0.353553385 : f32
    %23 = vector.broadcast %cst_6 : f32 to vector<4x16x16xf32>
    %24 = arith.mulf %22, %23 : vector<4x16x16xf32>
    %c0_7 = arith.constant 0 : index
    %c0_8 = arith.constant 0 : index
    %25 = vector.load %arg1[%c0_7, %c0_8] : memref<16x16xf32, #tpu.memory_space<vmem>>, vector<16x16xf32>
    %cst_9 = arith.constant 0.000000e+00 : f32
    %26 = vector.broadcast %cst_9 : f32 to vector<16x16xf32>
    %27 = arith.cmpf oeq, %25, %26 : vector<16x16xf32>
    %cst_10 = arith.constant -1.000000e+30 : f32
    %28 = vector.shape_cast %27 : vector<16x16xi1> to vector<1x16x16xi1>
    %29 = vector.broadcast %28 : vector<1x16x16xi1> to vector<4x16x16xi1>
    %30 = vector.broadcast %cst_10 : f32 to vector<4x16x16xf32>
    %31 = arith.select %29, %30, %24 : vector<4x16x16xi1>, vector<4x16x16xf32>
    %cst_11 = arith.constant dense<0xFF800000> : vector<4x16xf32>
    %32 = vector.multi_reduction <maximumf>, %31, %cst_11 [2] : vector<4x16x16xf32> to vector<4x16xf32>
    %33 = vector.shape_cast %32 : vector<4x16xf32> to vector<4x16x1xf32>
    %34 = vector.broadcast %33 : vector<4x16x1xf32> to vector<4x16x16xf32>
    %35 = arith.subf %31, %34 : vector<4x16x16xf32>
    %36 = math.exp %35 : vector<4x16x16xf32>
    %cst_12 = arith.constant dense<0.000000e+00> : vector<4x16xf32>
    %37 = vector.multi_reduction <add>, %36, %cst_12 [2] : vector<4x16x16xf32> to vector<4x16xf32>
    %38 = vector.shape_cast %37 : vector<4x16xf32> to vector<4x16x1xf32>
    %39 = tpu.reciprocal %38 {approx = true} : vector<4x16x1xf32> -> vector<4x16x1xf32>
    %40 = vector.broadcast %39 : vector<4x16x1xf32> to vector<4x16x16xf32>
    %41 = arith.mulf %36, %40 : vector<4x16x16xf32>
    %c0_13 = arith.constant 0 : index
    %c0_14 = arith.constant 0 : index
    %42 = vector.load %arg2[%c0_13, %c0_14] : memref<16x1xf32, #tpu.memory_space<vmem>>, vector<16x1xf32>
    %43 = vector.shape_cast %42 : vector<16x1xf32> to vector<1x16x1xf32>
    %44 = vector.broadcast %43 : vector<1x16x1xf32> to vector<4x16x16xf32>
    %45 = arith.mulf %41, %44 : vector<4x16x16xf32>
    %c0_15 = arith.constant 0 : index
    %c0_16 = arith.constant 0 : index
    %c0_17 = arith.constant 0 : index
    %46 = vector.load %arg5[%c0_15, %c0_16, %c0_17] : memref<4x8x32xbf16, #tpu.memory_space<vmem>>, vector<4x8x32xbf16>
    "tpu.trace_start"() <{level = 10 : i32, message = "hkd,hdo->hko"}> : () -> ()
    %cst_18 = arith.constant dense<0.000000e+00> : vector<4x16x32xf32>
    %47 = tpu.matmul %21, %46, %cst_18 {dimension_numbers = #tpu.dot_dimension_numbers<[2], [1], [1], [2], [0, 0, 0, 1, 1, 2], [0], [0]>} : vector<4x16x8xbf16>, vector<4x8x32xbf16>, vector<4x16x32xf32> -> vector<4x16x32xf32>
    "tpu.trace_stop"() : () -> ()
    %48 = arith.truncf %45 : vector<4x16x16xf32> to vector<4x16x16xbf16>
    %49 = arith.truncf %47 : vector<4x16x32xf32> to vector<4x16x32xbf16>
    "tpu.trace_start"() <{level = 10 : i32, message = "hqk,hko->hqo"}> : () -> ()
    %cst_19 = arith.constant dense<0.000000e+00> : vector<4x16x32xf32>
    %50 = tpu.matmul %48, %49, %cst_19 {dimension_numbers = #tpu.dot_dimension_numbers<[2], [1], [1], [2], [0, 0, 0, 1, 1, 2], [0], [0]>} : vector<4x16x16xbf16>, vector<4x16x32xbf16>, vector<4x16x32xf32> -> vector<4x16x32xf32>
    "tpu.trace_stop"() : () -> ()
    %cst_20 = arith.constant dense<0.000000e+00> : vector<16x32xf32>
    %51 = vector.multi_reduction <add>, %50, %cst_20 [0] : vector<4x16x32xf32> to vector<16x32xf32>
    %c0_21 = arith.constant 0 : index
    %c0_22 = arith.constant 0 : index
    %52 = vector.load %arg6[%c0_21, %c0_22] : memref<1x32xf32, #tpu.memory_space<vmem>>, vector<1x32xf32>
    %53 = vector.broadcast %52 : vector<1x32xf32> to vector<16x32xf32>
    %54 = arith.addf %51, %53 : vector<16x32xf32>
    %55 = arith.addf %0, %54 : vector<16x32xf32>
    %56 = vector.shape_cast %55 : vector<16x32xf32> to vector<2x8x32xf32>
    %cst_23 = arith.constant dense<0.000000e+00> : vector<2x32xf32>
    %57 = vector.multi_reduction <add>, %56, %cst_23 [1] : vector<2x8x32xf32> to vector<2x32xf32>
    %58 = vector.shape_cast %57 : vector<2x32xf32> to vector<2x1x32xf32>
    %cst_24 = arith.constant 8.000000e+00 : f32
    %59 = vector.broadcast %cst_24 : f32 to vector<2x1x32xf32>
    %60 = arith.divf %58, %59 : vector<2x1x32xf32>
    %61 = vector.broadcast %60 : vector<2x1x32xf32> to vector<2x8x32xf32>
    %62 = arith.subf %56, %61 : vector<2x8x32xf32>
    %63 = arith.mulf %62, %62 : vector<2x8x32xf32>
    %cst_25 = arith.constant dense<0.000000e+00> : vector<2x32xf32>
    %64 = vector.multi_reduction <add>, %63, %cst_25 [1] : vector<2x8x32xf32> to vector<2x32xf32>
    %65 = vector.shape_cast %64 : vector<2x32xf32> to vector<2x1x32xf32>
    %cst_26 = arith.constant 7.000000e+00 : f32
    %66 = vector.broadcast %cst_26 : f32 to vector<2x1x32xf32>
    %67 = arith.divf %65, %66 : vector<2x1x32xf32>
    %68 = vector.broadcast %60 : vector<2x1x32xf32> to vector<2x8x32xf32>
    %69 = arith.subf %56, %68 : vector<2x8x32xf32>
    %cst_27 = arith.constant 9.99999996E-13 : f32
    %70 = vector.broadcast %cst_27 : f32 to vector<2x1x32xf32>
    %71 = arith.addf %67, %70 : vector<2x1x32xf32>
    %72 = math.rsqrt %71 : vector<2x1x32xf32>
    %73 = vector.broadcast %72 : vector<2x1x32xf32> to vector<2x8x32xf32>
    %74 = arith.mulf %69, %73 : vector<2x8x32xf32>
    %c0_28 = arith.constant 0 : index
    %c0_29 = arith.constant 0 : index
    %75 = vector.load %arg7[%c0_28, %c0_29] : memref<1x32xf32, #tpu.memory_space<vmem>>, vector<1x32xf32>
    %76 = vector.shape_cast %75 : vector<1x32xf32> to vector<1x1x32xf32>
    %77 = vector.broadcast %76 : vector<1x1x32xf32> to vector<2x8x32xf32>
    %78 = arith.mulf %74, %77 : vector<2x8x32xf32>
    %c0_30 = arith.constant 0 : index
    %c0_31 = arith.constant 0 : index
    %79 = vector.load %arg8[%c0_30, %c0_31] : memref<1x32xf32, #tpu.memory_space<vmem>>, vector<1x32xf32>
    %80 = vector.shape_cast %79 : vector<1x32xf32> to vector<1x1x32xf32>
    %81 = vector.broadcast %80 : vector<1x1x32xf32> to vector<2x8x32xf32>
    %82 = arith.addf %78, %81 : vector<2x8x32xf32>
    %c0_32 = arith.constant 0 : index
    %c0_33 = arith.constant 0 : index
    %c0_34 = arith.constant 0 : index
    %83 = vector.load %arg9[%c0_32, %c0_33, %c0_34] : memref<2x8x32xf32, #tpu.memory_space<vmem>>, vector<2x8x32xf32>
    tpu.vector_store %arg9[%c0_32, %c0_33, %c0_34], %82 {strides = array<i32>} : memref<2x8x32xf32, #tpu.memory_space<vmem>>, vector<2x8x32xf32>,
    return
  }
}

</mosaic_0001>

<llo_original>
// kernel: mul.5
$region0: #{mul.5}
  %s0 = inlined_call_operand.vmem [shape: f32[2,8], index: 0, kind: input, shape index: {}]
  %s1 = inlined_call_operand.vmem [shape: f32[16], index: 1, kind: output, shape index: {}]
  $region1: #{mul.5} parent=0
    #allocation0 [shape = 'u8[4096]{0}', space=vmem, size = 0x1000, scoped, tag = 'scoped mem for output reshape']
    #allocation1 [shape = 'u8[4096]{0}', space=vmem, size = 0x1000, scoped, tag = 'scoped mem for input reshape']
    %s3 = ssub.s32 4, 1
    %v4 = vld [vmem:[%s0] sm:%s3]
    %5 = vst [vmem:[#allocation1] sm:%s3] %v4
    %v6 = vld [vmem:[#allocation1] sm:$0x1]
    %vm7 = vcmask 64512
    %8 = vst.msk [vmem:[#allocation0] sm:$0x1] %vm7, %v6
    %s9 = scalar_lea.vmem [#allocation1], 1
    %v10 = vld [vmem:[%s9] sm:$0x1]
    %11 = vrot.lane.b32.xlu0 %v10, 8
    %v12 = vpop.permute.xlu0 %11
    %vm13 = vcmask 130112
    %14 = vst.msk [vmem:[#allocation0] sm:$0x1] %vm13, %v12
    %s16 = ssub.s32 2, 1
    %v17 = vld [vmem:[#allocation0] sm:%s16]
    %s19 = ssub.s32 2, 1
    %20 = vst [vmem:[%s1] sm:%s19] %v17

// kernel: mha_pallas.1
$region0: #{mha_pallas.1}
  #allocation0 [shape = 'u32[]', space=smem, size = 0x4, offset = 0x4, fixed_abs, tag = 'smem constant byte address 0x4 - core index']
  #allocation1 [shape = 'u32[72,128]{1,0:T(1,128)}', space=vmem, size = 0x9000, scoped, tag = 'internal scratch']
  %s0 = inlined_call_operand.vmem [shape: f32[16,32], index: 0, kind: input, shape index: {}]
  %s1 = inlined_call_operand.vmem [shape: f32[16,16], index: 1, kind: input, shape index: {}]
  %s2 = inlined_call_operand.vmem [shape: f32[16,1], index: 2, kind: input, shape index: {}]
  %s3 = inlined_call_operand.vmem [shape: bf16[32,96], index: 3, kind: input, shape index: {}]
  %s4 = inlined_call_operand.vmem [shape: f32[1,96], index: 4, kind: input, shape index: {}]
  %s5 = inlined_call_operand.vmem [shape: bf16[4,8,32], index: 5, kind: input, shape index: {}]
  %s6 = inlined_call_operand.vmem [shape: f32[1,32], index: 6, kind: input, shape index: {}]
  %s7 = inlined_call_operand.vmem [shape: f32[1,32], index: 7, kind: input, shape index: {}]
  %s8 = inlined_call_operand.vmem [shape: f32[1,32], index: 8, kind: input, shape index: {}]
  %s9 = inlined_call_operand.hbm [shape: f32[2,8,32], index: 9, kind: output, shape index: {}]
  %s10 = sld [smem:[#allocation0]]
  $region46: #{mha_pallas.1} parent=0
    _
  %s12 = ssub.s32 1, %s10
  %s13 = scalar_select 0, %s12, %s10
  $region1: #{mha_pallas.1} parent=0
    #allocation2 [shape = 'u8[8192]{0}', space=vmem, size = 0x2000, scoped, tag = 'output window, operand 0, single buffered']
    #allocation3 [shape = 's32[1]{0}', space=sflag, size = 0x4, scoped, tag = 'scoped memory for mha_pallas.1']
    %14 = vsyncpa [#allocation3], 0
    // Predicated region
    $region2: #{mha_pallas.1} parent=1 // pred_check
      _
    $region3: #{mha_pallas.1} parent=1 // pred_check_branch
      %16 = sbr.rel (0) target = $region5
    $region4: #{mha_pallas.1} parent=1 // pred_region
      _
    $region5: #{mha_pallas.1} parent=1 // pred_fallthru
      _
    // Predicated region
    $region6: #{mha_pallas.1} parent=1 // pred_check
      _
    $region7: #{mha_pallas.1} parent=1 // pred_check_branch
      %18 = sbr.rel (0) target = $region9
    $region8: #{mha_pallas.1} parent=1 // pred_region
      _
    $region9: #{mha_pallas.1} parent=1 // pred_fallthru
      _
    // Predicated region
    $region10: #{mha_pallas.1} parent=1 // pred_check
      _
    $region11: #{mha_pallas.1} parent=1 // pred_check_branch
      %20 = sbr.rel (0) target = $region13
    $region12: #{mha_pallas.1} parent=1 // pred_region
      _
    $region13: #{mha_pallas.1} parent=1 // pred_fallthru
      _
    // Predicated region
    $region14: #{mha_pallas.1} parent=1 // pred_check
      _
    $region15: #{mha_pallas.1} parent=1 // pred_check_branch
      %22 = sbr.rel (0) target = $region17
    $region16: #{mha_pallas.1} parent=1 // pred_region
      _
    $region17: #{mha_pallas.1} parent=1 // pred_fallthru
      _
    // Predicated region
    $region18: #{mha_pallas.1} parent=1 // pred_check
      _
    $region19: #{mha_pallas.1} parent=1 // pred_check_branch
      %24 = sbr.rel (0) target = $region21
    $region20: #{mha_pallas.1} parent=1 // pred_region
      _
    $region21: #{mha_pallas.1} parent=1 // pred_fallthru
      _
    // Predicated region
    $region22: #{mha_pallas.1} parent=1 // pred_check
      _
    $region23: #{mha_pallas.1} parent=1 // pred_check_branch
      %26 = sbr.rel (0) target = $region25
    $region24: #{mha_pallas.1} parent=1 // pred_region
      _
    $region25: #{mha_pallas.1} parent=1 // pred_fallthru
      _
    // Predicated region
    $region26: #{mha_pallas.1} parent=1 // pred_check
      _
    $region27: #{mha_pallas.1} parent=1 // pred_check_branch
      %28 = sbr.rel (0) target = $region29
    $region28: #{mha_pallas.1} parent=1 // pred_region
      _
    $region29: #{mha_pallas.1} parent=1 // pred_fallthru
      _
    // Predicated region
    $region30: #{mha_pallas.1} parent=1 // pred_check
      _
    $region31: #{mha_pallas.1} parent=1 // pred_check_branch
      %30 = sbr.rel (0) target = $region33
    $region32: #{mha_pallas.1} parent=1 // pred_region
      _
    $region33: #{mha_pallas.1} parent=1 // pred_fallthru
      _
    // Predicated region
    $region34: #{mha_pallas.1} parent=1 // pred_check
      _
    $region35: #{mha_pallas.1} parent=1 // pred_check_branch
      %32 = sbr.rel (0) target = $region37
    $region36: #{mha_pallas.1} parent=1 // pred_region
      _
    $region37: #{mha_pallas.1} parent=1 // pred_fallthru
      _
    %v34 = vld [vmem:[%s0] sm:$0xff]
    %v35 = vld [vmem:[%s0 + $0x8] sm:$0xff]
    %v36 = vpack.c.bf16 %v35, %v34
    %v37 = vld [vmem:[%s3] sm:$0xf]
    %v38 = vld [vmem:[%s3 + $0x4] sm:$0xf]
    %v39 = vld [vmem:[%s3 + $0x8] sm:$0xf]
    %v40 = vld [vmem:[%s3 + $0xc] sm:$0xf]
    %v41 = vld [vmem:[%s4] sm:$0x1]
    %v43 = vperm.slane %v41, 0
    %v49 = vunpack.c.l.b16 %v37
    %v50 = vunpack.c.l.b16 %v38
    %v51 = vunpack.c.l.b16 %v39
    %v52 = vunpack.c.l.b16 %v40
    %v53 = vpack.c.b16 %v50, %v49
    %v54 = vpack.c.b16 %v52, %v51
    %vm57 = vcmask 261120
    %v59 = vsel %vm57, %v36, 0
    %61 = vmatpush.bf16.msra.mxu0 0
    %62 = vmatpush.bf16.msra.mxu0 0
    %63 = vmatpush.bf16.msra.mxu0 0
    %64 = vmatpush.bf16.msra.mxu0 0
    %65 = vmatpush.bf16.msra.mxu0 0
    %66 = vmatpush.bf16.msra.mxu0 0
    %67 = vmatpush.bf16.msra.mxu0 %v54
    %68 = vmatpush.bf16.msra.mxu0 %v53
    %69 = vmatmul.bf16.gmra.mxu0 %v59
    %v70 = vpop.f32.mrf.mxu0
    %v71 = vadd.f32 %v43, %v70
    %v72 = vpop.f32.mrf.mxu0
    %v73 = vadd.f32 %v43, %v72
    %74 = vdwg.mxu0
    %77 = vrot.lane.b32.xlu0 %v71, 104
    %v78 = vpop.permute.xlu0 %77
    %79 = vrot.lane.b32.xlu0 %v73, 104
    %v80 = vpop.permute.xlu0 %79
    %83 = vrot.lane.b32.xlu0 %v71, 80
    %v84 = vpop.permute.xlu0 %83
    %85 = vrot.lane.b32.xlu0 %v73, 80
    %v86 = vpop.permute.xlu0 %85
    %89 = vrot.lane.b32.xlu0 %v71, 56
    %v90 = vpop.permute.xlu0 %89
    %91 = vrot.lane.b32.xlu0 %v73, 56
    %v92 = vpop.permute.xlu0 %91
    %v95 = vpack.c.bf16 %v71, %v71
    %v96 = vpack.c.bf16 %v73, %v73
    %v97 = vpack.c.bf16 %v78, %v78
    %v98 = vpack.c.bf16 %v80, %v80
    %v99 = vpack.c.bf16 %v84, %v84
    %v100 = vpack.c.bf16 %v86, %v86
    %v101 = vpack.c.bf16 %v90, %v90
    %v102 = vpack.c.bf16 %v92, %v92
    %v105 = vunpack.c.l.b16 %v95
    %v106 = vunpack.c.l.b16 %v96
    %v107 = vpack.c.b16 %v106, %v105
    %108 = vrot.lane.b32.xlu0 %v107, 120
    %v109 = vpop.permute.xlu0 %108
    %vm110 = vcmask 64512
    %v112 = vsel %vm110, %v107, 0
    %v115 = vsel %vm110, %v109, 0
    %117 = vmatpush.bf16.xpose.msra.mxu0 0
    %118 = vmatpush.bf16.xpose.msra.mxu0 0
    %119 = vmatpush.bf16.xpose.msra.mxu0 0
    %120 = vmatpush.bf16.xpose.msra.mxu0 0
    %121 = vmatpush.bf16.xpose.msra.mxu0 0
    %122 = vmatpush.bf16.xpose.msra.mxu0 0
    %123 = vmatpush.bf16.xpose.msra.mxu0 0
    %124 = vmatpush.bf16.xpose.msra.mxu0 %v115
    %125 = vmatmul.bf16.gmra.mxu0 %v112
    %v126 = vpop.f32.mrf.mxu0
    %v127 = vadd.f32 0.0, %v126
    %v128 = vpop.f32.mrf.mxu0
    %v129 = vadd.f32 0.0, %v128
    %130 = vdwg.mxu0
    %v133 = vunpack.c.l.b16 %v97
    %v134 = vunpack.c.l.b16 %v98
    %v135 = vpack.c.b16 %v134, %v133
    %136 = vrot.lane.b32.xlu0 %v135, 120
    %v137 = vpop.permute.xlu0 %136
    %v139 = vsel %vm110, %v135, 0
    %v142 = vsel %vm110, %v137, 0
    %144 = vmatpush.bf16.xpose.msra.mxu0 0
    %145 = vmatpush.bf16.xpose.msra.mxu0 0
    %146 = vmatpush.bf16.xpose.msra.mxu0 0
    %147 = vmatpush.bf16.xpose.msra.mxu0 0
    %148 = vmatpush.bf16.xpose.msra.mxu0 0
    %149 = vmatpush.bf16.xpose.msra.mxu0 0
    %150 = vmatpush.bf16.xpose.msra.mxu0 0
    %151 = vmatpush.bf16.xpose.msra.mxu0 %v142
    %152 = vmatmul.bf16.gmra.mxu0 %v139
    %v153 = vpop.f32.mrf.mxu0
    %v154 = vadd.f32 0.0, %v153
    %v155 = vpop.f32.mrf.mxu0
    %v156 = vadd.f32 0.0, %v155
    %157 = vdwg.mxu0
    %v160 = vunpack.c.l.b16 %v99
    %v161 = vunpack.c.l.b16 %v100
    %v162 = vpack.c.b16 %v161, %v160
    %163 = vrot.lane.b32.xlu0 %v162, 120
    %v164 = vpop.permute.xlu0 %163
    %v166 = vsel %vm110, %v162, 0
    %v169 = vsel %vm110, %v164, 0
    %171 = vmatpush.bf16.xpose.msra.mxu0 0
    %172 = vmatpush.bf16.xpose.msra.mxu0 0
    %173 = vmatpush.bf16.xpose.msra.mxu0 0
    %174 = vmatpush.bf16.xpose.msra.mxu0 0
    %175 = vmatpush.bf16.xpose.msra.mxu0 0
    %176 = vmatpush.bf16.xpose.msra.mxu0 0
    %177 = vmatpush.bf16.xpose.msra.mxu0 0
    %178 = vmatpush.bf16.xpose.msra.mxu0 %v169
    %179 = vmatmul.bf16.gmra.mxu0 %v166
    %v180 = vpop.f32.mrf.mxu0
    %v181 = vadd.f32 0.0, %v180
    %v182 = vpop.f32.mrf.mxu0
    %v183 = vadd.f32 0.0, %v182
    %184 = vdwg.mxu0
    %v187 = vunpack.c.l.b16 %v101
    %v188 = vunpack.c.l.b16 %v102
    %v189 = vpack.c.b16 %v188, %v187
    %190 = vrot.lane.b32.xlu0 %v189, 120
    %v191 = vpop.permute.xlu0 %190
    %v193 = vsel %vm110, %v189, 0
    %v196 = vsel %vm110, %v191, 0
    %198 = vmatpush.bf16.xpose.msra.mxu0 0
    %199 = vmatpush.bf16.xpose.msra.mxu0 0
    %200 = vmatpush.bf16.xpose.msra.mxu0 0
    %201 = vmatpush.bf16.xpose.msra.mxu0 0
    %202 = vmatpush.bf16.xpose.msra.mxu0 0
    %203 = vmatpush.bf16.xpose.msra.mxu0 0
    %204 = vmatpush.bf16.xpose.msra.mxu0 0
    %205 = vmatpush.bf16.xpose.msra.mxu0 %v196
    %206 = vmatmul.bf16.gmra.mxu0 %v193
    %v207 = vpop.f32.mrf.mxu0
    %v208 = vadd.f32 0.0, %v207
    %v209 = vpop.f32.mrf.mxu0
    %v210 = vadd.f32 0.0, %v209
    %211 = vdwg.mxu0
    %v212 = vmul.f32 %v127, 0.35355338
    %v213 = vmul.f32 %v129, 0.35355338
    %v214 = vmul.f32 %v154, 0.35355338
    %v215 = vmul.f32 %v156, 0.35355338
    %v216 = vmul.f32 %v181, 0.35355338
    %v217 = vmul.f32 %v183, 0.35355338
    %v218 = vmul.f32 %v208, 0.35355338
    %v219 = vmul.f32 %v210, 0.35355338
    %v220 = vld [vmem:[%s1] sm:$0xff]
    %v221 = vld [vmem:[%s1 + $0x8] sm:$0xff]
    %vm222 = vcmp.eq.f32.partialorder %v220, 0.0
    %vm223 = vcmp.eq.f32.partialorder %v221, 0.0
    %v224 = vsel %vm222, 1, 0
    %v225 = vsel %vm223, 1, 0
    %vm226 = vcmp.eq.s32.totalorder %v224, 1
    %vm227 = vcmp.eq.s32.totalorder %v225, 1
    %v228 = vsel %vm226, -1e+30, %v212
    %v229 = vsel %vm227, -1e+30, %v213
    %v230 = vsel %vm226, -1e+30, %v214
    %v231 = vsel %vm227, -1e+30, %v215
    %v232 = vsel %vm226, -1e+30, %v216
    %v233 = vsel %vm227, -1e+30, %v217
    %v234 = vsel %vm226, -1e+30, %v218
    %v235 = vsel %vm227, -1e+30, %v219
    %vm236 = vcmask 130048
    %v237 = vsel %vm236, %v228, -inf
    %238 = vmax.xlane.f32.xlu0 %v237
    %v239 = vpop.xlane.xlu0 %238
    %v240 = vsel %vm236, %v229, -inf
    %241 = vmax.xlane.f32.xlu0 %v240
    %v242 = vpop.xlane.xlu0 %241
    %v243 = vsel %vm236, %v230, -inf
    %244 = vmax.xlane.f32.xlu0 %v243
    %v245 = vpop.xlane.xlu0 %244
    %v246 = vsel %vm236, %v231, -inf
    %247 = vmax.xlane.f32.xlu0 %v246
    %v248 = vpop.xlane.xlu0 %247
    %v249 = vsel %vm236, %v232, -inf
    %250 = vmax.xlane.f32.xlu0 %v249
    %v251 = vpop.xlane.xlu0 %250
    %v252 = vsel %vm236, %v233, -inf
    %253 = vmax.xlane.f32.xlu0 %v252
    %v254 = vpop.xlane.xlu0 %253
    %v255 = vsel %vm236, %v234, -inf
    %256 = vmax.xlane.f32.xlu0 %v255
    %v257 = vpop.xlane.xlu0 %256
    %v258 = vsel %vm236, %v235, -inf
    %259 = vmax.xlane.f32.xlu0 %v258
    %v260 = vpop.xlane.xlu0 %259
    %v261 = vsub.f32 %v228, %v239
    %v262 = vsub.f32 %v229, %v242
    %v263 = vsub.f32 %v230, %v245
    %v264 = vsub.f32 %v231, %v248
    %v265 = vsub.f32 %v232, %v251
    %v266 = vsub.f32 %v233, %v254
    %v267 = vsub.f32 %v234, %v257
    %v268 = vsub.f32 %v235, %v260
    %v269 = vmul.f32 %v261, 1.442695
    %v270 = vpow.pop %v269
    %v271 = vmul.f32 %v262, 1.442695
    %v272 = vpow.pop %v271
    %v273 = vmul.f32 %v263, 1.442695
    %v274 = vpow.pop %v273
    %v275 = vmul.f32 %v264, 1.442695
    %v276 = vpow.pop %v275
    %v277 = vmul.f32 %v265, 1.442695
    %v278 = vpow.pop %v277
    %v279 = vmul.f32 %v266, 1.442695
    %v280 = vpow.pop %v279
    %v281 = vmul.f32 %v267, 1.442695
    %v282 = vpow.pop %v281
    %v283 = vmul.f32 %v268, 1.442695
    %v284 = vpow.pop %v283
    %v285 = vsel %vm236, %v270, 0.0
    %286 = vadd.xlane.f32.xlu0 %v285
    %v287 = vpop.xlane.xlu0 %286
    %v288 = vsel %vm236, %v272, 0.0
    %289 = vadd.xlane.f32.xlu0 %v288
    %v290 = vpop.xlane.xlu0 %289
    %v291 = vsel %vm236, %v274, 0.0
    %292 = vadd.xlane.f32.xlu0 %v291
    %v293 = vpop.xlane.xlu0 %292
    %v294 = vsel %vm236, %v276, 0.0
    %295 = vadd.xlane.f32.xlu0 %v294
    %v296 = vpop.xlane.xlu0 %295
    %v297 = vsel %vm236, %v278, 0.0
    %298 = vadd.xlane.f32.xlu0 %v297
    %v299 = vpop.xlane.xlu0 %298
    %v300 = vsel %vm236, %v280, 0.0
    %301 = vadd.xlane.f32.xlu0 %v300
    %v302 = vpop.xlane.xlu0 %301
    %v303 = vsel %vm236, %v282, 0.0
    %304 = vadd.xlane.f32.xlu0 %v303
    %v305 = vpop.xlane.xlu0 %304
    %v306 = vsel %vm236, %v284, 0.0
    %307 = vadd.xlane.f32.xlu0 %v306
    %v308 = vpop.xlane.xlu0 %307
    %v309 = vrcp.pop %v287
    %v310 = vrcp.pop %v290
    %v311 = vrcp.pop %v293
    %v312 = vrcp.pop %v296
    %v313 = vrcp.pop %v299
    %v314 = vrcp.pop %v302
    %v315 = vrcp.pop %v305
    %v316 = vrcp.pop %v308
    %v317 = vmul.f32 %v270, %v309
    %v318 = vmul.f32 %v272, %v310
    %v319 = vmul.f32 %v274, %v311
    %v320 = vmul.f32 %v276, %v312
    %v321 = vmul.f32 %v278, %v313
    %v322 = vmul.f32 %v280, %v314
    %v323 = vmul.f32 %v282, %v315
    %v324 = vmul.f32 %v284, %v316
    %v325 = vld [vmem:[%s2] sm:$0xff]
    %v326 = vld [vmem:[%s2 + $0x8] sm:$0xff]
    %328 = vset.pattern.permute.xlu0 0
    %329 = vperm.xlu0 %328, %v325
    %v330 = vpop.permute.xlu0 %329
    %333 = vset.pattern.permute.xlu0 0
    %334 = vperm.xlu0 %333, %v326
    %v335 = vpop.permute.xlu0 %334
    %v337 = vmul.f32 %v317, %v330
    %v338 = vmul.f32 %v318, %v335
    %v339 = vmul.f32 %v319, %v330
    %v340 = vmul.f32 %v320, %v335
    %v341 = vmul.f32 %v321, %v330
    %v342 = vmul.f32 %v322, %v335
    %v343 = vmul.f32 %v323, %v330
    %v344 = vmul.f32 %v324, %v335
    %v345 = vld [vmem:[%s5] sm:$0xf]
    %v346 = vld [vmem:[%s5 + $0x4] sm:$0xf]
    %v347 = vld [vmem:[%s5 + $0x8] sm:$0xf]
    %v348 = vld [vmem:[%s5 + $0xc] sm:$0xf]
    %349 = vrot.lane.b32.xlu0 %v107, 112
    %v350 = vpop.permute.xlu0 %349
    %v352 = vsel %vm110, %v350, 0
    %vm354 = vcmask 1043456
    %v356 = vsel %vm354, %v345, 0
    %358 = vmatpush.bf16.msra.mxu0 0
    %359 = vmatpush.bf16.msra.mxu0 0
    %360 = vmatpush.bf16.msra.mxu0 0
    %361 = vmatpush.bf16.msra.mxu0 0
    %362 = vmatpush.bf16.msra.mxu0 0
    %363 = vmatpush.bf16.msra.mxu0 0
    %364 = vmatpush.bf16.msra.mxu0 0
    %365 = vmatpush.bf16.msra.mxu0 %v356
    %366 = vmatmul.bf16.gmra.mxu0 %v352
    %v367 = vpop.f32.mrf.mxu0
    %v368 = vadd.f32 0.0, %v367
    %v369 = vpop.f32.mrf.mxu0
    %v370 = vadd.f32 0.0, %v369
    %371 = vdwg.mxu0
    %372 = vrot.lane.b32.xlu0 %v135, 112
    %v373 = vpop.permute.xlu0 %372
    %v375 = vsel %vm110, %v373, 0
    %v378 = vsel %vm354, %v346, 0
    %380 = vmatpush.bf16.msra.mxu0 0
    %381 = vmatpush.bf16.msra.mxu0 0
    %382 = vmatpush.bf16.msra.mxu0 0
    %383 = vmatpush.bf16.msra.mxu0 0
    %384 = vmatpush.bf16.msra.mxu0 0
    %385 = vmatpush.bf16.msra.mxu0 0
    %386 = vmatpush.bf16.msra.mxu0 0
    %387 = vmatpush.bf16.msra.mxu0 %v378
    %388 = vmatmul.bf16.gmra.mxu0 %v375
    %v389 = vpop.f32.mrf.mxu0
    %v390 = vadd.f32 0.0, %v389
    %v391 = vpop.f32.mrf.mxu0
    %v392 = vadd.f32 0.0, %v391
    %393 = vdwg.mxu0
    %394 = vrot.lane.b32.xlu0 %v162, 112
    %v395 = vpop.permute.xlu0 %394
    %v397 = vsel %vm110, %v395, 0
    %v400 = vsel %vm354, %v347, 0
    %402 = vmatpush.bf16.msra.mxu0 0
    %403 = vmatpush.bf16.msra.mxu0 0
    %404 = vmatpush.bf16.msra.mxu0 0
    %405 = vmatpush.bf16.msra.mxu0 0
    %406 = vmatpush.bf16.msra.mxu0 0
    %407 = vmatpush.bf16.msra.mxu0 0
    %408 = vmatpush.bf16.msra.mxu0 0
    %409 = vmatpush.bf16.msra.mxu0 %v400
    %410 = vmatmul.bf16.gmra.mxu0 %v397
    %v411 = vpop.f32.mrf.mxu0
    %v412 = vadd.f32 0.0, %v411
    %v413 = vpop.f32.mrf.mxu0
    %v414 = vadd.f32 0.0, %v413
    %415 = vdwg.mxu0
    %416 = vrot.lane.b32.xlu0 %v189, 112
    %v417 = vpop.permute.xlu0 %416
    %v419 = vsel %vm110, %v417, 0
    %v422 = vsel %vm354, %v348, 0
    %424 = vmatpush.bf16.msra.mxu0 0
    %425 = vmatpush.bf16.msra.mxu0 0
    %426 = vmatpush.bf16.msra.mxu0 0
    %427 = vmatpush.bf16.msra.mxu0 0
    %428 = vmatpush.bf16.msra.mxu0 0
    %429 = vmatpush.bf16.msra.mxu0 0
    %430 = vmatpush.bf16.msra.mxu0 0
    %431 = vmatpush.bf16.msra.mxu0 %v422
    %432 = vmatmul.bf16.gmra.mxu0 %v419
    %v433 = vpop.f32.mrf.mxu0
    %v434 = vadd.f32 0.0, %v433
    %v435 = vpop.f32.mrf.mxu0
    %v436 = vadd.f32 0.0, %v435
    %437 = vdwg.mxu0
    %v438 = vpack.c.bf16 %v337, %v337
    %v439 = vpack.c.bf16 %v338, %v338
    %v440 = vpack.c.bf16 %v339, %v339
    %v441 = vpack.c.bf16 %v340, %v340
    %v442 = vpack.c.bf16 %v341, %v341
    %v443 = vpack.c.bf16 %v342, %v342
    %v444 = vpack.c.bf16 %v343, %v343
    %v445 = vpack.c.bf16 %v344, %v344
    %v446 = vpack.c.bf16 %v368, %v368
    %v447 = vpack.c.bf16 %v370, %v370
    %v448 = vpack.c.bf16 %v390, %v390
    %v449 = vpack.c.bf16 %v392, %v392
    %v450 = vpack.c.bf16 %v412, %v412
    %v451 = vpack.c.bf16 %v414, %v414
    %v452 = vpack.c.bf16 %v434, %v434
    %v453 = vpack.c.bf16 %v436, %v436
    %v456 = vunpack.c.l.b16 %v438
    %v457 = vunpack.c.l.b16 %v439
    %v458 = vpack.c.b16 %v457, %v456
    %v461 = vunpack.c.l.b16 %v446
    %v462 = vunpack.c.l.b16 %v447
    %v463 = vpack.c.b16 %v462, %v461
    %v466 = vsel %vm236, %v458, 0
    %468 = vmatpush.bf16.msra.mxu0 0
    %469 = vmatpush.bf16.msra.mxu0 0
    %470 = vmatpush.bf16.msra.mxu0 0
    %471 = vmatpush.bf16.msra.mxu0 0
    %472 = vmatpush.bf16.msra.mxu0 0
    %473 = vmatpush.bf16.msra.mxu0 0
    %474 = vmatpush.bf16.msra.mxu0 0
    %475 = vmatpush.bf16.msra.mxu0 %v463
    %476 = vmatmul.bf16.gmra.mxu0 %v466
    %v477 = vpop.f32.mrf.mxu0
    %v478 = vadd.f32 0.0, %v477
    %v479 = vpop.f32.mrf.mxu0
    %v480 = vadd.f32 0.0, %v479
    %481 = vdwg.mxu0
    %v484 = vunpack.c.l.b16 %v440
    %v485 = vunpack.c.l.b16 %v441
    %v486 = vpack.c.b16 %v485, %v484
    %v489 = vunpack.c.l.b16 %v448
    %v490 = vunpack.c.l.b16 %v449
    %v491 = vpack.c.b16 %v490, %v489
    %v494 = vsel %vm236, %v486, 0
    %496 = vmatpush.bf16.msra.mxu0 0
    %497 = vmatpush.bf16.msra.mxu0 0
    %498 = vmatpush.bf16.msra.mxu0 0
    %499 = vmatpush.bf16.msra.mxu0 0
    %500 = vmatpush.bf16.msra.mxu0 0
    %501 = vmatpush.bf16.msra.mxu0 0
    %502 = vmatpush.bf16.msra.mxu0 0
    %503 = vmatpush.bf16.msra.mxu0 %v491
    %504 = vmatmul.bf16.gmra.mxu0 %v494
    %v505 = vpop.f32.mrf.mxu0
    %v506 = vadd.f32 0.0, %v505
    %v507 = vpop.f32.mrf.mxu0
    %v508 = vadd.f32 0.0, %v507
    %509 = vdwg.mxu0
    %v512 = vunpack.c.l.b16 %v442
    %v513 = vunpack.c.l.b16 %v443
    %v514 = vpack.c.b16 %v513, %v512
    %v517 = vunpack.c.l.b16 %v450
    %v518 = vunpack.c.l.b16 %v451
    %v519 = vpack.c.b16 %v518, %v517
    %v522 = vsel %vm236, %v514, 0
    %524 = vmatpush.bf16.msra.mxu0 0
    %525 = vmatpush.bf16.msra.mxu0 0
    %526 = vmatpush.bf16.msra.mxu0 0
    %527 = vmatpush.bf16.msra.mxu0 0
    %528 = vmatpush.bf16.msra.mxu0 0
    %529 = vmatpush.bf16.msra.mxu0 0
    %530 = vmatpush.bf16.msra.mxu0 0
    %531 = vmatpush.bf16.msra.mxu0 %v519
    %532 = vmatmul.bf16.gmra.mxu0 %v522
    %v533 = vpop.f32.mrf.mxu0
    %v534 = vadd.f32 0.0, %v533
    %v535 = vpop.f32.mrf.mxu0
    %v536 = vadd.f32 0.0, %v535
    %537 = vdwg.mxu0
    %v540 = vunpack.c.l.b16 %v444
    %v541 = vunpack.c.l.b16 %v445
    %v542 = vpack.c.b16 %v541, %v540
    %v545 = vunpack.c.l.b16 %v452
    %v546 = vunpack.c.l.b16 %v453
    %v547 = vpack.c.b16 %v546, %v545
    %v550 = vsel %vm236, %v542, 0
    %552 = vmatpush.bf16.msra.mxu0 0
    %553 = vmatpush.bf16.msra.mxu0 0
    %554 = vmatpush.bf16.msra.mxu0 0
    %555 = vmatpush.bf16.msra.mxu0 0
    %556 = vmatpush.bf16.msra.mxu0 0
    %557 = vmatpush.bf16.msra.mxu0 0
    %558 = vmatpush.bf16.msra.mxu0 0
    %559 = vmatpush.bf16.msra.mxu0 %v547
    %560 = vmatmul.bf16.gmra.mxu0 %v550
    %v561 = vpop.f32.mrf.mxu0
    %v562 = vadd.f32 0.0, %v561
    %v563 = vpop.f32.mrf.mxu0
    %v564 = vadd.f32 0.0, %v563
    %565 = vdwg.mxu0
    %v566 = vsel %vm57, %v478, 0.0
    %v567 = vsel %vm57, %v506, 0.0
    %v568 = vadd.f32 %v566, %v567
    %v569 = vsel %vm57, %v534, 0.0
    %v570 = vadd.f32 %v568, %v569
    %v571 = vsel %vm57, %v562, 0.0
    %v572 = vadd.f32 %v570, %v571
    %v573 = vsel %vm57, %v480, 0.0
    %v574 = vsel %vm57, %v508, 0.0
    %v575 = vadd.f32 %v573, %v574
    %v576 = vsel %vm57, %v536, 0.0
    %v577 = vadd.f32 %v575, %v576
    %v578 = vsel %vm57, %v564, 0.0
    %v579 = vadd.f32 %v577, %v578
    %v580 = vld [vmem:[%s6] sm:$0x1]
    %v582 = vperm.slane %v580, 0
    %v584 = vadd.f32 %v572, %v582
    %v585 = vadd.f32 %v579, %v582
    %v586 = vadd.f32 %v34, %v584
    %v587 = vadd.f32 %v35, %v585
    %v588 = vsel %vm57, %v586, 0.0
    %v589 = vrot.slane %v588, 4
    %v590 = vadd.f32 %v588, %v589
    %v591 = vrot.slane %v590, 2
    %v592 = vadd.f32 %v590, %v591
    %v593 = vrot.slane %v592, 1
    %v594 = vadd.f32 %v592, %v593
    %v595 = vsel %vm57, %v587, 0.0
    %v596 = vrot.slane %v595, 4
    %v597 = vadd.f32 %v595, %v596
    %v598 = vrot.slane %v597, 2
    %v599 = vadd.f32 %v597, %v598
    %v600 = vrot.slane %v599, 1
    %v601 = vadd.f32 %v599, %v600
    %v602 = vrcp.pop 8.0
    %v603 = vmul.f32 8.0, %v602
    %v604 = vsub.f32 1.0, %v603
    %v605 = vmul.f32 %v602, %v604
    %v606 = vadd.f32 %v602, %v605
    %vm607 = vweird.f32 %v602
    %v608 = vsel %vm607, %v602, %v606
    %v609 = vmul.f32 %v594, %v608
    %v610 = vmul.f32 %v601, %v608
    %v611 = vsub.f32 %v586, %v609
    %v612 = vsub.f32 %v587, %v610
    %v613 = vmul.f32 %v611, %v611
    %v614 = vmul.f32 %v612, %v612
    %v615 = vsel %vm57, %v613, 0.0
    %v616 = vrot.slane %v615, 4
    %v617 = vadd.f32 %v615, %v616
    %v618 = vrot.slane %v617, 2
    %v619 = vadd.f32 %v617, %v618
    %v620 = vrot.slane %v619, 1
    %v621 = vadd.f32 %v619, %v620
    %v622 = vsel %vm57, %v614, 0.0
    %v623 = vrot.slane %v622, 4
    %v624 = vadd.f32 %v622, %v623
    %v625 = vrot.slane %v624, 2
    %v626 = vadd.f32 %v624, %v625
    %v627 = vrot.slane %v626, 1
    %v628 = vadd.f32 %v626, %v627
    %v629 = vrcp.pop 7.0
    %v630 = vmul.f32 7.0, %v629
    %v631 = vsub.f32 1.0, %v630
    %v632 = vmul.f32 %v629, %v631
    %v633 = vadd.f32 %v629, %v632
    %vm634 = vweird.f32 %v629
    %v635 = vsel %vm634, %v629, %v633
    %v636 = vmul.f32 %v621, %v635
    %v637 = vmul.f32 %v628, %v635
    %v638 = vadd.f32 %v636, 1e-12
    %v639 = vadd.f32 %v637, 1e-12
    %v640 = vrsqrt.pop %v638
    %v641 = vmul.f32 %v640, %v638
    %v642 = vmul.f32 %v641, %v640
    %v643 = vmul.f32 0.5, %v642
    %v644 = vsub.f32 1.5, %v643
    %v645 = vmul.f32 %v640, %v644
    %vm646 = vweird.f32 %v638
    %vm647 = vweird.f32 %v640
    %vm648 = vmor %vm646, %vm647
    %v649 = vsel %vm648, %v640, %v645
    %v650 = vrsqrt.pop %v639
    %v651 = vmul.f32 %v650, %v639
    %v652 = vmul.f32 %v651, %v650
    %v653 = vmul.f32 0.5, %v652
    %v654 = vsub.f32 1.5, %v653
    %v655 = vmul.f32 %v650, %v654
    %vm656 = vweird.f32 %v639
    %vm657 = vweird.f32 %v650
    %vm658 = vmor %vm656, %vm657
    %v659 = vsel %vm658, %v650, %v655
    %v660 = vmul.f32 %v611, %v649
    %v661 = vmul.f32 %v612, %v659
    %v662 = vld [vmem:[%s7] sm:$0x1]
    %v664 = vperm.slane %v662, 0
    %v666 = vmul.f32 %v660, %v664
    %v667 = vmul.f32 %v661, %v664
    %v668 = vld [vmem:[%s8] sm:$0x1]
    %v670 = vperm.slane %v668, 0
    %v672 = vadd.f32 %v666, %v670
    %v673 = vadd.f32 %v667, %v670
    %674 = vst.msk [vmem:[#allocation2] sm:$0xff] %vm57, %v672
    %675 = vst.msk [vmem:[#allocation2 + $0x8] sm:$0xff] %vm57, %v673
    // Predicated region
    $region38: #{mha_pallas.1} parent=1 // pred_check
      _
    $region39: #{mha_pallas.1} parent=1 // pred_check_branch
      %677 = sbr.rel (0) target = $region41
    $region40: #{mha_pallas.1} parent=1 // pred_region
      %679 = vsyncadd [#allocation3], 0
      %s680 = sshll.u32 [#allocation2], 4
      %s681 = int_to_ptr.vmem [resolvable:$true] %s680
      %s682 = sshll.u32 %s9, 4
      %s683 = int_to_ptr.hbm [resolvable:$true] %s682
      %688 = dma.vmem_to_hbm [thread:$0]  %s681, 256, %s683, [#allocation3], 128, 128, 8
    $region41: #{mha_pallas.1} parent=1 // pred_fallthru
      _
    // Predicated region
    $region42: #{mha_pallas.1} parent=1 // pred_check
      _
    $region43: #{mha_pallas.1} parent=1 // pred_check_branch
      %690 = sbr.rel (0) target = $region45
    $region44: #{mha_pallas.1} parent=1 // pred_region
      %692 = dma.done [#allocation3], 256
    $region45: #{mha_pallas.1} parent=1 // pred_fallthru
      _
    %693 = vsyncpa [#allocation3], 1

</llo_original>
